<compile_context>
chip_gen: v7x
topology: tpu7x:2x2x1
jax: 0.10.0
libtpu: 0.0.40
codegen_flags: <defaults>
</compile_context>

<pallas_src>
import functools

import jax
import jax.numpy as jnp
from jax import lax
from jax.experimental import pallas as pl
from jax.experimental.pallas import tpu as pltpu

_LEAKY_SLOPE = 0.01  # torch.nn.LeakyReLU default


def _round_up(v, m):
    return ((v + m - 1) // m) * m


def _mlp_pad_kernel(x_ref, w1_ref, b1_ref, w2_ref, b2_ref, o_ref, *,
                    n_valid, tile_n, bf16_matmul):
    """One row-tile of: LeakyReLU(x @ W1 + b1) @ W2 + b2, trailing rows zeroed."""
    i = pl.program_id(0)
    row_start = i * tile_n

    # --- Pad-only tile: no matmuls / activation, just write zeros. -----------
    @pl.when(row_start >= n_valid)
    def _pad_only():
        o_ref[...] = jnp.zeros_like(o_ref)

    # --- Tile with at least one valid row. -----------------------------------
    @pl.when(row_start < n_valid)
    def _compute():
        x = x_ref[...].astype(jnp.float32)                      # (tile_n, 3)
        w1 = w1_ref[...].astype(jnp.float32)                    # (3, d_hidden)

        # Layer 1 on the VPU: bias init + 3 broadcast multiply-adds.
        # (K=3 would otherwise pad to the full MXU contraction width and cost
        #  as many vmatmul pushes as the real layer-2 matmul.)
        h = b1_ref[...].astype(jnp.float32)                     # (1, d_hidden)
        h = h + x[:, 0:1] * w1[0:1, :]
        h = h + x[:, 1:2] * w1[1:2, :]
        h = h + x[:, 2:3] * w1[2:3, :]                          # (tile_n, d_hidden)

        # LeakyReLU without an explicit compare.
        h = jnp.maximum(h, _LEAKY_SLOPE * h)

        # Layer 2 on the MXU.
        if bf16_matmul:
            # Single-pass bf16 matmul, f32 accumulation (w2 already bf16).
            y = jnp.dot(h.astype(jnp.bfloat16), w2_ref[...],
                        preferred_element_type=jnp.float32)
        else:
            # Exact (multi-pass) f32 path — slower, for strict parity needs.
            y = jnp.dot(h, w2_ref[...].astype(jnp.float32),
                        preferred_element_type=jnp.float32,
                        precision=lax.Precision.HIGHEST)
        y = y + b2_ref[...].astype(jnp.float32)                 # (tile_n, d_model)

        # Only the boundary tile pays the row mask (zeroes the (n_padding+1)
        # pad rows and any garbage rows from a partial input block).
        @pl.when(row_start + tile_n > n_valid)
        def _masked_store():
            row = row_start + lax.broadcasted_iota(jnp.int32, (tile_n, 1), 0)
            o_ref[...] = jnp.where(row < n_valid, y, 0.0).astype(o_ref.dtype)

        @pl.when(row_start + tile_n <= n_valid)
        def _plain_store():
            o_ref[...] = y.astype(o_ref.dtype)


def d3_positional_encoder2(x, w1, b1, w2, b2, n_padding=0, *,
                           tile_n=None, bf16_matmul=True):
    """JAX/Pallas equivalent of D3PositionalEncoder2(d_model).forward(x, n_padding).

    Weights are stored already transposed vs. torch.nn.Linear:
      w1: (3, 2*d_model), b1: (2*d_model,), w2: (2*d_model, d_model), b2: (d_model,)
    """
    n, three = x.shape
    assert three == 3, "input must be (N, 3)"
    d_in, d_hidden = w1.shape
    assert d_in == 3 and b1.shape == (d_hidden,)
    assert w2.shape[0] == d_hidden
    d_model = w2.shape[1]
    assert b2.shape == (d_model,)

    n_out = n + n_padding + 1

    # Row tile: big to amortize the ~0.35 us/step grid overhead, but capped so
    # double-buffered blocks + the (tile_n, 2*d_model) f32 h temporary stay
    # well inside v7x's 32 MiB scoped VMEM (v5e/v6e have more headroom).
    if tile_n is None:
        tile_n = 2048 if d_model <= 256 else 1024
    tile_n = max(8, min(int(tile_n), _round_up(n_out, 8)))
    # Keep >= 2 grid steps whenever possible so the "parallel" row axis can be
    # sharded across both TensorCores on v7x.
    if pl.cdiv(n_out, tile_n) < 2 and n_out > 8:
        tile_n = max(8, _round_up(pl.cdiv(n_out, 2), 8))
    grid_n = pl.cdiv(n_out, tile_n)
    n_in_blocks = max(1, pl.cdiv(n, tile_n))

    b1_2d = b1.reshape(1, d_hidden)
    b2_2d = b2.reshape(1, d_model)
    # Pass w2 pre-cast to bf16: halves its per-step DMA and removes an
    # in-kernel cast pass. Layer-1 weights/biases stay f32 (exact VPU math).
    w2_in = w2.astype(jnp.bfloat16) if bf16_matmul else w2

    kernel = functools.partial(_mlp_pad_kernel, n_valid=n, tile_n=tile_n,
                               bf16_matmul=bf16_matmul)

    # Clamp the input block index so pad-only grid steps still read an
    # in-bounds (unused) input block.
    x_map = lambda i: (jnp.minimum(i, n_in_blocks - 1), 0)
    const_map = lambda i: (0, 0)   # weights/biases: VMEM-resident across steps

    # Note: the constant-index weight/bias blocks could be single-buffered
    # (pipeline_mode=pl.Buffered(1)) to save a few MiB at very large d_model on
    # v7x; omitted here since the capped tile_n already fits the scoped budget.
    return pl.pallas_call(
        kernel,
        out_shape=jax.ShapeDtypeStruct((n_out, d_model), x.dtype),
        grid=(grid_n,),
        in_specs=[
            pl.BlockSpec((tile_n, 3), x_map),
            pl.BlockSpec((3, d_hidden), const_map),
            pl.BlockSpec((1, d_hidden), const_map),
            pl.BlockSpec((d_hidden, d_model), const_map),
            pl.BlockSpec((1, d_model), const_map),
        ],
        out_specs=pl.BlockSpec((tile_n, d_model), lambda i: (i, 0)),
        compiler_params=pltpu.CompilerParams(
            dimension_semantics=("parallel",)),
    )(x, w1, b1_2d, w2_in, b2_2d)


# ----------------------------- references -----------------------------------

def _reference_exact(x, w1, b1, w2, b2, n_padding=0):
    """Pure-JAX reference mirroring the PyTorch forward, full f32 precision."""
    h = jnp.dot(x, w1, precision=lax.Precision.HIGHEST) + b1
    h = jnp.where(h > 0, h, _LEAKY_SLOPE * h)
    y = jnp.dot(h, w2, precision=lax.Precision.HIGHEST) + b2
    pad = jnp.zeros((n_padding + 1, y.shape[1]), y.dtype)
    return jnp.concatenate([y, pad], axis=0)


def _reference_matched(x, w1, b1, w2, b2, n_padding=0):
    """Reference using the same numerics as the kernel's default (bf16) path."""
    h = (b1[None, :]
         + x[:, 0:1] * w1[0:1, :]
         + x[:, 1:2] * w1[1:2, :]
         + x[:, 2:3] * w1[2:3, :])
    h = jnp.maximum(h, _LEAKY_SLOPE * h)
    y = jnp.dot(h.astype(jnp.bfloat16), w2.astype(jnp.bfloat16),
                preferred_element_type=jnp.float32) + b2
    pad = jnp.zeros((n_padding + 1, y.shape[1]), y.dtype)
    return jnp.concatenate([y, pad], axis=0)


if __name__ == "__main__":
    key = jax.random.PRNGKey(0)
    k_x, k_w1, k_b1, k_w2, k_b2 = jax.random.split(key, 5)

    N, d_model = 16, 128                     # hidden = 2*d_model = 256
    d_hidden = 2 * d_model

    x = jax.random.normal(k_x, (N, 3), dtype=jnp.float32)
    w1 = jax.random.normal(k_w1, (3, d_hidden), dtype=jnp.float32) * (1.0 / 3.0 ** 0.5)
    b1 = jax.random.normal(k_b1, (d_hidden,), dtype=jnp.float32) * 0.1
    w2 = jax.random.normal(k_w2, (d_hidden, d_model), dtype=jnp.float32) * (1.0 / d_hidden ** 0.5)
    b2 = jax.random.normal(k_b2, (d_model,), dtype=jnp.float32) * 0.1

    for n_padding in (0, 5):
        out = jax.block_until_ready(
            d3_positional_encoder2(x, w1, b1, w2, b2, n_padding=n_padding))
        assert out.shape == (N + n_padding + 1, d_model), out.shape

        # Tight parity vs a reference with matching (bf16-MXU) numerics.
        ref_m = _reference_matched(x, w1, b1, w2, b2, n_padding=n_padding)
        assert bool(jnp.allclose(out, ref_m, rtol=2e-3, atol=2e-3)), \
            "mismatch vs matched-precision reference"

        # Loose parity vs the exact f32 reference (bf16 MXU rounding tolerance).
        ref_e = _reference_exact(x, w1, b1, w2, b2, n_padding=n_padding)
        assert bool(jnp.allclose(out, ref_e, rtol=3e-2, atol=3e-2)), \
            "mismatch vs exact f32 reference"

    print("KERNEL_OK")
</pallas_src>

<mosaic_0001>
module attributes {stable_mosaic.version = 11 : i64} {
  func.func @_mlp_pad_kernel(%arg0: i32, %arg1: memref<16x3xf32, #tpu.memory_space<vmem>>, %arg2: memref<3x256xf32, #tpu.memory_space<vmem>>, %arg3: memref<1x256xf32, #tpu.memory_space<vmem>>, %arg4: memref<256x128xbf16, #tpu.memory_space<vmem>>, %arg5: memref<1x128xf32, #tpu.memory_space<vmem>>, %arg6: memref<16x128xf32, #tpu.memory_space<vmem>>) attributes {dimension_semantics = [#tpu.dimension_semantics<parallel>], iteration_bounds = array<i64: 2>, scalar_prefetch = 0 : i64, scratch_operands = 0 : i64, tpu.core_type = #tpu.core_type<tc>, window_params = [{transform_indices = @transform_0, window_bounds = array<i64: 16, 3>}, {pipeline_mode = #tpu.pipeline_mode<synchronous>, transform_indices = @transform_1, window_bounds = array<i64: 3, 256>}, {pipeline_mode = #tpu.pipeline_mode<synchronous>, transform_indices = @transform_2, window_bounds = array<i64: 1, 256>}, {pipeline_mode = #tpu.pipeline_mode<synchronous>, transform_indices = @transform_3, window_bounds = array<i64: 256, 128>}, {pipeline_mode = #tpu.pipeline_mode<synchronous>, transform_indices = @transform_4, window_bounds = array<i64: 1, 128>}, {transform_indices = @transform_5, window_bounds = array<i64: 16, 128>}]} {
    %c16_i32 = arith.constant 16 : i32
    %0 = arith.muli %arg0, %c16_i32 : i32
    %c16_i32_0 = arith.constant 16 : i32
    %1 = arith.cmpi sge, %0, %c16_i32_0 : i32
    %2 = arith.extui %1 : i1 to i32
    %c0_i32 = arith.constant 0 : i32
    %3 = arith.cmpi ne, %2, %c0_i32 : i32
    scf.if %3 {
      %cst = arith.constant 0.000000e+00 : f32
      %7 = vector.broadcast %cst : f32 to vector<16x128xf32>
      %c0 = arith.constant 0 : index
      %c0_3 = arith.constant 0 : index
      %8 = vector.load %arg6[%c0, %c0_3] : memref<16x128xf32, #tpu.memory_space<vmem>>, vector<16x128xf32>
      tpu.vector_store %arg6[%c0, %c0_3], %7 {strides = array<i32>} : memref<16x128xf32, #tpu.memory_space<vmem>>, vector<16x128xf32>,
    } else {
    }
    %c16_i32_1 = arith.constant 16 : i32
    %4 = arith.cmpi slt, %0, %c16_i32_1 : i32
    %5 = arith.extui %4 : i1 to i32
    %c0_i32_2 = arith.constant 0 : i32
    %6 = arith.cmpi ne, %5, %c0_i32_2 : i32
    scf.if %6 {
      %c0 = arith.constant 0 : index
      %c0_3 = arith.constant 0 : index
      %7 = vector.load %arg1[%c0, %c0_3] : memref<16x3xf32, #tpu.memory_space<vmem>>, vector<16x3xf32>
      %c0_4 = arith.constant 0 : index
      %c0_5 = arith.constant 0 : index
      %8 = vector.load %arg2[%c0_4, %c0_5] : memref<3x256xf32, #tpu.memory_space<vmem>>, vector<3x256xf32>
      %c0_6 = arith.constant 0 : index
      %c0_7 = arith.constant 0 : index
      %9 = vector.load %arg3[%c0_6, %c0_7] : memref<1x256xf32, #tpu.memory_space<vmem>>, vector<1x256xf32>
      %10 = vector.extract_strided_slice %7 {offsets = [0, 0], sizes = [16, 1], strides = [1, 1]} : vector<16x3xf32> to vector<16x1xf32>
      %11 = vector.extract_strided_slice %8 {offsets = [0, 0], sizes = [1, 256], strides = [1, 1]} : vector<3x256xf32> to vector<1x256xf32>
      %12 = vector.broadcast %10 : vector<16x1xf32> to vector<16x256xf32>
      %13 = vector.broadcast %11 : vector<1x256xf32> to vector<16x256xf32>
      %14 = arith.mulf %12, %13 : vector<16x256xf32>
      %15 = vector.broadcast %9 : vector<1x256xf32> to vector<16x256xf32>
      %16 = arith.addf %15, %14 : vector<16x256xf32>
      %17 = vector.extract_strided_slice %7 {offsets = [0, 1], sizes = [16, 1], strides = [1, 1]} : vector<16x3xf32> to vector<16x1xf32>
      %18 = vector.extract_strided_slice %8 {offsets = [1, 0], sizes = [1, 256], strides = [1, 1]} : vector<3x256xf32> to vector<1x256xf32>
      %19 = vector.broadcast %17 : vector<16x1xf32> to vector<16x256xf32>
      %20 = vector.broadcast %18 : vector<1x256xf32> to vector<16x256xf32>
      %21 = arith.mulf %19, %20 : vector<16x256xf32>
      %22 = arith.addf %16, %21 : vector<16x256xf32>
      %23 = vector.extract_strided_slice %7 {offsets = [0, 2], sizes = [16, 1], strides = [1, 1]} : vector<16x3xf32> to vector<16x1xf32>
      %24 = vector.extract_strided_slice %8 {offsets = [2, 0], sizes = [1, 256], strides = [1, 1]} : vector<3x256xf32> to vector<1x256xf32>
      %25 = vector.broadcast %23 : vector<16x1xf32> to vector<16x256xf32>
      %26 = vector.broadcast %24 : vector<1x256xf32> to vector<16x256xf32>
      %27 = arith.mulf %25, %26 : vector<16x256xf32>
      %28 = arith.addf %22, %27 : vector<16x256xf32>
      %cst = arith.constant 0.00999999977 : f32
      %29 = vector.broadcast %cst : f32 to vector<16x256xf32>
      %30 = arith.mulf %29, %28 : vector<16x256xf32>
      %31 = arith.maximumf %28, %30 : vector<16x256xf32>
      %32 = arith.truncf %31 : vector<16x256xf32> to vector<16x256xbf16>
      %c0_8 = arith.constant 0 : index
      %c0_9 = arith.constant 0 : index
      %33 = vector.load %arg4[%c0_8, %c0_9] : memref<256x128xbf16, #tpu.memory_space<vmem>>, vector<256x128xbf16>
      %cst_10 = arith.constant dense<0.000000e+00> : vector<16x128xf32>
      %34 = tpu.matmul %32, %33, %cst_10 {dimension_numbers = #tpu.dot_dimension_numbers<[1], [0], [0], [1], [0, 0, 1, 1], [], []>} : vector<16x256xbf16>, vector<256x128xbf16>, vector<16x128xf32> -> vector<16x128xf32>
      %c0_11 = arith.constant 0 : index
      %c0_12 = arith.constant 0 : index
      %35 = vector.load %arg5[%c0_11, %c0_12] : memref<1x128xf32, #tpu.memory_space<vmem>>, vector<1x128xf32>
      %36 = vector.broadcast %35 : vector<1x128xf32> to vector<16x128xf32>
      %37 = arith.addf %34, %36 : vector<16x128xf32>
      %c16_i32_13 = arith.constant 16 : i32
      %38 = arith.addi %0, %c16_i32_13 : i32
      %c16_i32_14 = arith.constant 16 : i32
      %39 = arith.cmpi sgt, %38, %c16_i32_14 : i32
      %40 = arith.extui %39 : i1 to i32
      %c0_i32_15 = arith.constant 0 : i32
      %41 = arith.cmpi ne, %40, %c0_i32_15 : i32
      scf.if %41 {
        %46 = tpu.iota {dimensions = array<i32: 0>} : vector<16x1xi32>
        %47 = vector.broadcast %0 : i32 to vector<16x1xi32>
        %48 = arith.addi %47, %46 : vector<16x1xi32>
        %c16_i32_19 = arith.constant 16 : i32
        %49 = vector.broadcast %c16_i32_19 : i32 to vector<16x1xi32>
        %50 = arith.cmpi slt, %48, %49 : vector<16x1xi32>
        %cst_20 = arith.constant 0.000000e+00 : f32
        %51 = vector.shape_cast %50 : vector<16x1xi1> to vector<16x1xi1>
        %52 = vector.broadcast %51 : vector<16x1xi1> to vector<16x128xi1>
        %53 = vector.broadcast %cst_20 : f32 to vector<16x128xf32>
        %54 = arith.select %52, %37, %53 : vector<16x128xi1>, vector<16x128xf32>
        %c0_21 = arith.constant 0 : index
        %c0_22 = arith.constant 0 : index
        %55 = vector.load %arg6[%c0_21, %c0_22] : memref<16x128xf32, #tpu.memory_space<vmem>>, vector<16x128xf32>
        tpu.vector_store %arg6[%c0_21, %c0_22], %54 {strides = array<i32>} : memref<16x128xf32, #tpu.memory_space<vmem>>, vector<16x128xf32>,
      } else {
      }
      %c16_i32_16 = arith.constant 16 : i32
      %42 = arith.addi %0, %c16_i32_16 : i32
      %c16_i32_17 = arith.constant 16 : i32
      %43 = arith.cmpi sle, %42, %c16_i32_17 : i32
      %44 = arith.extui %43 : i1 to i32
      %c0_i32_18 = arith.constant 0 : i32
      %45 = arith.cmpi ne, %44, %c0_i32_18 : i32
      scf.if %45 {
        %c0_19 = arith.constant 0 : index
        %c0_20 = arith.constant 0 : index
        %46 = vector.load %arg6[%c0_19, %c0_20] : memref<16x128xf32, #tpu.memory_space<vmem>>, vector<16x128xf32>
        tpu.vector_store %arg6[%c0_19, %c0_20], %37 {strides = array<i32>} : memref<16x128xf32, #tpu.memory_space<vmem>>, vector<16x128xf32>,
      } else {
      }
    } else {
    }
    return
  }
  func.func @transform_0(%arg0: i32) -> (i32, i32) {
    %c0_i32 = arith.constant 0 : i32
    %0 = arith.minsi %arg0, %c0_i32 : i32
    %c0_i32_0 = arith.constant 0 : i32
    %c0_i32_1 = arith.constant 0 : i32
    return %0, %c0_i32_0 : i32, i32
  }
  func.func @transform_1(%arg0: i32) -> (i32, i32) {
    %c0_i32 = arith.constant 0 : i32
    %c0_i32_0 = arith.constant 0 : i32
    %c0_i32_1 = arith.constant 0 : i32
    return %c0_i32, %c0_i32_0 : i32, i32
  }
  func.func @transform_2(%arg0: i32) -> (i32, i32) {
    %c0_i32 = arith.constant 0 : i32
    %c0_i32_0 = arith.constant 0 : i32
    %c0_i32_1 = arith.constant 0 : i32
    return %c0_i32, %c0_i32_0 : i32, i32
  }
  func.func @transform_3(%arg0: i32) -> (i32, i32) {
    %c0_i32 = arith.constant 0 : i32
    %c0_i32_0 = arith.constant 0 : i32
    %c0_i32_1 = arith.constant 0 : i32
    return %c0_i32, %c0_i32_0 : i32, i32
  }
  func.func @transform_4(%arg0: i32) -> (i32, i32) {
    %c0_i32 = arith.constant 0 : i32
    %c0_i32_0 = arith.constant 0 : i32
    %c0_i32_1 = arith.constant 0 : i32
    return %c0_i32, %c0_i32_0 : i32, i32
  }
  func.func @transform_5(%arg0: i32) -> (i32, i32) {
    %c0_i32 = arith.constant 0 : i32
    %c0_i32_0 = arith.constant 0 : i32
    return %arg0, %c0_i32 : i32, i32
  }
}

</mosaic_0001>

<llo_original>
// kernel: tpu_custom_call.1
$region0: #{tpu_custom_call.1}
  #allocation0 [shape = 'u32[]', space=smem, size = 0x4, offset = 0x4, fixed_abs, tag = 'smem constant byte address 0x4 - core index']
  #allocation1 [shape = 'u32[144,128]{1,0:T(1,128)}', space=vmem, size = 0x12000, scoped, tag = 'internal scratch']
  %s0 = inlined_call_operand.vmem [shape: f32[16,3], index: 0, kind: input, shape index: {}]
  %s1 = inlined_call_operand.vmem [shape: f32[3,256], index: 1, kind: input, shape index: {}]
  %s2 = inlined_call_operand.vmem [shape: f32[1,256], index: 2, kind: input, shape index: {}]
  %s3 = inlined_call_operand.hbm [shape: bf16[256,128], index: 3, kind: input, shape index: {}]
  %s4 = inlined_call_operand.vmem [shape: f32[1,128], index: 4, kind: input, shape index: {}]
  %s5 = inlined_call_operand.hbm [shape: f32[17,128], index: 5, kind: output, shape index: {}]
  %s6 = sld [smem:[#allocation0]]
  $region73: #{tpu_custom_call.1} parent=0
    _
  %s8 = ssub.s32 1, %s6
  %s9 = scalar_select 0, %s8, %s6
  $region1: #{tpu_custom_call.1} parent=0
    #allocation2 [shape = 'u8[65536]{0}', space=vmem, size = 0x10000, scoped, tag = 'input window, operand 3, single buffered']
    #allocation3 [shape = 's32[2]{0}', space=sflag, size = 0x8, scoped, tag = 'scoped memory for tpu_custom_call.1']
    #allocation4 [shape = 's32[2]{0}', space=sflag, size = 0x8, scoped, tag = 'scoped memory for tpu_custom_call.1']
    #allocation5 [shape = 'u8[16384]{0}', space=vmem, size = 0x4000, scoped, tag = 'output window, operand 0']
    %10 = vsyncpa [#allocation3], 0
    %11 = vsyncpa [#allocation4], 0
    %s12 = scalar_lea.sflag [#allocation4], 1
    %13 = vsyncpa %s12, 0
    loop: start=0, step=1, limit=4
    $region2: #{tpu_custom_call.1} parent=1 // loop_pre_header
      _
    $region3: #{tpu_custom_call.1} parent=1 // loop_header
      %s15 = sphi 0, %s19
      %p16 = scmp.ge.s32.totalorder %s15, 4
      %s29 = sphi 0, %s31
      %s32 = sphi 0, %s29
      %s33 = sphi 0, %s32
      %s49 = sphi 0, %s33
      %s53 = sphi 0, %s53
      %s55 = sphi 0, %s53
      %s56 = sphi 0, %s55
      %s70 = sphi 0, %s56
      %s74 = sphi 0, %s74
      %s76 = sphi 0, %s74
      %s77 = sphi 0, %s76
      %s91 = sphi 0, %s77
      %s95 = sphi 0, %s95
      %s97 = sphi 0, %s95
      %s98 = sphi 0, %s97
      %s112 = sphi 0, %s98
      %s116 = sphi 0, %s116
      %s118 = sphi 0, %s116
      %s119 = sphi 0, %s118
      %s133 = sphi 0, %s119
      %s139 = sphi 0, %s141
      %s142 = sphi 0, %s139
      %s143 = sphi 0, %s142
      %s159 = sphi 0, %s143
    $region4: #{tpu_custom_call.1} parent=1 // loop_header_branch
      %18 = sbr.rel (%p16) target = $region8
    $region5: #{tpu_custom_call.1} parent=1 // loop_body
      %s20 = ssub.s32 %s15, 1
      %s21 = ssub.s32 %s15, 2
      %s22 = sadd.s32 %s15, 1
      %p23 = scmp.lt.s32.totalorder %s15, 0
      %s24 = scalar_select %p23, %s15, 0
      %p25 = scmp.lt.s32.totalorder %s22, 0
      %s26 = scalar_select %p25, %s22, 0
      %s27 = ssub.s32 %s24, %s26
      %p28 = scmp.eq.s32.totalorder %s27, 0
      %s30 = sadd.s32 %s29, 1
      %s31 = scalar_select %p28, %s29, %s30
      %p34 = pneg %p28
      %p35 = scmp.eq.s32.totalorder %s15, 1
      %p36 = por %p34, %p35
      %p37 = scmp.ne.s32.totalorder %s29, %s32
      %p38 = scmp.eq.s32.totalorder %s15, 0
      %p39 = por %p37, %p38
      %p40 = scmp.ne.s32.totalorder %s29, %s32
      %p41 = scmp.eq.s32.totalorder %s20, 1
      %p42 = por %p40, %p41
      %p43 = scmp.ne.s32.totalorder %s32, %s33
      %p44 = scmp.eq.s32.totalorder %s20, 0
      %p45 = por %p43, %p44
      %p46 = scmp.ne.s32.totalorder %s32, %s33
      %p47 = scmp.eq.s32.totalorder %s21, 1
      %p48 = por %p46, %p47
      %p50 = scmp.ne.s32.totalorder %s33, %s49
      %p51 = scmp.eq.s32.totalorder %s21, 0
      %p52 = por %p50, %p51
      %s54 = sadd.s32 %s53, 1
      %p57 = scmp.eq.s32.totalorder %s15, 1
      %p58 = scmp.ne.s32.totalorder %s53, %s55
      %p59 = scmp.eq.s32.totalorder %s15, 0
      %p60 = por %p58, %p59
      %p61 = scmp.ne.s32.totalorder %s53, %s55
      %p62 = scmp.eq.s32.totalorder %s20, 1
      %p63 = por %p61, %p62
      %p64 = scmp.ne.s32.totalorder %s55, %s56
      %p65 = scmp.eq.s32.totalorder %s20, 0
      %p66 = por %p64, %p65
      %p67 = scmp.ne.s32.totalorder %s55, %s56
      %p68 = scmp.eq.s32.totalorder %s21, 1
      %p69 = por %p67, %p68
      %p71 = scmp.ne.s32.totalorder %s56, %s70
      %p72 = scmp.eq.s32.totalorder %s21, 0
      %p73 = por %p71, %p72
      %s75 = sadd.s32 %s74, 1
      %p78 = scmp.eq.s32.totalorder %s15, 1
      %p79 = scmp.ne.s32.totalorder %s74, %s76
      %p80 = scmp.eq.s32.totalorder %s15, 0
      %p81 = por %p79, %p80
      %p82 = scmp.ne.s32.totalorder %s74, %s76
      %p83 = scmp.eq.s32.totalorder %s20, 1
      %p84 = por %p82, %p83
      %p85 = scmp.ne.s32.totalorder %s76, %s77
      %p86 = scmp.eq.s32.totalorder %s20, 0
      %p87 = por %p85, %p86
      %p88 = scmp.ne.s32.totalorder %s76, %s77
      %p89 = scmp.eq.s32.totalorder %s21, 1
      %p90 = por %p88, %p89
      %p92 = scmp.ne.s32.totalorder %s77, %s91
      %p93 = scmp.eq.s32.totalorder %s21, 0
      %p94 = por %p92, %p93
      %s96 = sadd.s32 %s95, 1
      %p99 = scmp.eq.s32.totalorder %s15, 1
      %p100 = scmp.ne.s32.totalorder %s95, %s97
      %p101 = scmp.eq.s32.totalorder %s15, 0
      %p102 = por %p100, %p101
      %p103 = scmp.ne.s32.totalorder %s95, %s97
      %p104 = scmp.eq.s32.totalorder %s20, 1
      %p105 = por %p103, %p104
      %p106 = scmp.ne.s32.totalorder %s97, %s98
      %p107 = scmp.eq.s32.totalorder %s20, 0
      %p108 = por %p106, %p107
      %p109 = scmp.ne.s32.totalorder %s97, %s98
      %p110 = scmp.eq.s32.totalorder %s21, 1
      %p111 = por %p109, %p110
      %p113 = scmp.ne.s32.totalorder %s98, %s112
      %p114 = scmp.eq.s32.totalorder %s21, 0
      %p115 = por %p113, %p114
      %s117 = sadd.s32 %s116, 1
      %p120 = scmp.eq.s32.totalorder %s15, 1
      %p121 = scmp.ne.s32.totalorder %s116, %s118
      %p122 = scmp.eq.s32.totalorder %s15, 0
      %p123 = por %p121, %p122
      %p124 = scmp.ne.s32.totalorder %s116, %s118
      %p125 = scmp.eq.s32.totalorder %s20, 1
      %p126 = por %p124, %p125
      %p127 = scmp.ne.s32.totalorder %s118, %s119
      %p128 = scmp.eq.s32.totalorder %s20, 0
      %p129 = por %p127, %p128
      %p130 = scmp.ne.s32.totalorder %s118, %s119
      %p131 = scmp.eq.s32.totalorder %s21, 1
      %p132 = por %p130, %p131
      %p134 = scmp.ne.s32.totalorder %s119, %s133
      %p135 = scmp.eq.s32.totalorder %s21, 0
      %p136 = por %p134, %p135
      %s137 = ssub.s32 %s15, %s22
      %p138 = scmp.eq.s32.totalorder %s137, 0
      %s140 = sadd.s32 %s139, 1
      %s141 = scalar_select %p138, %s139, %s140
      %p144 = pneg %p138
      %p145 = scmp.eq.s32.totalorder %s15, 1
      %p146 = por %p144, %p145
      %p147 = scmp.ne.s32.totalorder %s139, %s142
      %p148 = scmp.eq.s32.totalorder %s15, 0
      %p149 = por %p147, %p148
      %p150 = scmp.ne.s32.totalorder %s139, %s142
      %p151 = scmp.eq.s32.totalorder %s20, 1
      %p152 = por %p150, %p151
      %p153 = scmp.ne.s32.totalorder %s142, %s143
      %p154 = scmp.eq.s32.totalorder %s20, 0
      %p155 = por %p153, %p154
      %p156 = scmp.ne.s32.totalorder %s142, %s143
      %p157 = scmp.eq.s32.totalorder %s21, 1
      %p158 = por %p156, %p157
      %p160 = scmp.ne.s32.totalorder %s143, %s159
      %p161 = scmp.eq.s32.totalorder %s21, 0
      %p162 = por %p160, %p161
      %p163 = scmp.le.s32.totalorder 1, %s15
      %p164 = scmp.lt.s32.totalorder %s15, 3
      %p165 = pnand %p163, %p164
      %p166 = pneg %p165
      // Predicated region
      $region9: #{tpu_custom_call.1} parent=5 // pred_check
        _
      $region10: #{tpu_custom_call.1} parent=5 // pred_check_branch
        %168 = sbr.rel (%p165) target = $region12
      $region11: #{tpu_custom_call.1} parent=5 // pred_region
        %s169 = ssub.s32 %s15, 1
        // Predicated region
        $region13: #{tpu_custom_call.1} parent=11 // pred_check
          %p170 = pneg %p66
        $region14: #{tpu_custom_call.1} parent=11 // pred_check_branch
          %172 = sbr.rel (%p170) target = $region16
        $region15: #{tpu_custom_call.1} parent=11 // pred_region
          _
        $region16: #{tpu_custom_call.1} parent=11 // pred_fallthru
          _
        // Predicated region
        $region17: #{tpu_custom_call.1} parent=11 // pred_check
          %p173 = pneg %p87
        $region18: #{tpu_custom_call.1} parent=11 // pred_check_branch
          %175 = sbr.rel (%p173) target = $region20
        $region19: #{tpu_custom_call.1} parent=11 // pred_region
          _
        $region20: #{tpu_custom_call.1} parent=11 // pred_fallthru
          _
        // Predicated region
        $region21: #{tpu_custom_call.1} parent=11 // pred_check
          %p176 = pneg %p108
        $region22: #{tpu_custom_call.1} parent=11 // pred_check_branch
          %178 = sbr.rel (%p176) target = $region24
        $region23: #{tpu_custom_call.1} parent=11 // pred_region
          %s180 = ssub.s32 2048, 2048
          %181 = vsyncadd [#allocation3], %s180
          %s182 = sshll.u32 [#allocation2], 4
          %s183 = int_to_ptr.vmem [resolvable:$true] %s182
          %188 = dma.hbm_to_vmem [thread:$0]  %s3, 2048, %s183, [#allocation3], 64, 64, 4
        $region24: #{tpu_custom_call.1} parent=11 // pred_fallthru
          _
        // Predicated region
        $region25: #{tpu_custom_call.1} parent=11 // pred_check
          %p189 = pneg %p129
        $region26: #{tpu_custom_call.1} parent=11 // pred_check_branch
          %191 = sbr.rel (%p189) target = $region28
        $region27: #{tpu_custom_call.1} parent=11 // pred_region
          _
        $region28: #{tpu_custom_call.1} parent=11 // pred_fallthru
          _
      $region12: #{tpu_custom_call.1} parent=5 // pred_fallthru
        _
      %p192 = scmp.lt.s32.totalorder %s15, 2
      // Predicated region
      $region29: #{tpu_custom_call.1} parent=5 // pred_check
        %p193 = pneg %p192
      $region30: #{tpu_custom_call.1} parent=5 // pred_check_branch
        %195 = sbr.rel (%p193) target = $region32
      $region31: #{tpu_custom_call.1} parent=5 // pred_region
        // Predicated region
        $region33: #{tpu_custom_call.1} parent=31 // pred_check
          %p196 = pneg %p39
        $region34: #{tpu_custom_call.1} parent=31 // pred_check_branch
          %198 = sbr.rel (%p196) target = $region36
        $region35: #{tpu_custom_call.1} parent=31 // pred_region
          %p199 = scmp.lt.s32.totalorder %s15, 0
          %s200 = scalar_select %p199, %s15, 0
          %s201 = smul.u32 2, %s200
          %p202 = scmp.lt.s32.totalorder %s201, 1
          %s203 = scalar_select %p202, %s201, 1
          %s204 = smul.addr %s203, 8
          %s205 = scalar_lea.vmem %s0, %s204
          %p206 = scmp.lt.s32.totalorder %s15, 0
          %s207 = scalar_select %p206, %s15, 0
          %s208 = smul.u32 2, %s207
        $region36: #{tpu_custom_call.1} parent=31 // pred_fallthru
          _
      $region32: #{tpu_custom_call.1} parent=5 // pred_fallthru
        _
      %p209 = scmp.le.s32.totalorder 1, %s15
      %p210 = scmp.lt.s32.totalorder %s15, 3
      %p211 = pnand %p209, %p210
      %p212 = pneg %p211
      // Predicated region
      $region37: #{tpu_custom_call.1} parent=5 // pred_check
        _
      $region38: #{tpu_custom_call.1} parent=5 // pred_check_branch
        %214 = sbr.rel (%p211) target = $region40
      $region39: #{tpu_custom_call.1} parent=5 // pred_region
        %s215 = ssub.s32 %s15, 1
        // Predicated region
        $region41: #{tpu_custom_call.1} parent=39 // pred_check
          %p216 = pneg %p108
        $region42: #{tpu_custom_call.1} parent=39 // pred_check_branch
          %218 = sbr.rel (%p216) target = $region44
        $region43: #{tpu_custom_call.1} parent=39 // pred_region
          %219 = dma.done [#allocation3], 2048
        $region44: #{tpu_custom_call.1} parent=39 // pred_fallthru
          _
        %p220 = scmp.lt.s32.totalorder %s20, 0
        %s221 = scalar_select %p220, %s20, 0
        %s222 = smul.u32 2, %s221
        %p223 = scmp.lt.s32.totalorder %s222, 1
        %s224 = scalar_select %p223, %s222, 1
        %s225 = smul.addr %s224, 8
        %s226 = scalar_lea.vmem %s0, %s225
        %p227 = pneg %p45
        %p228 = pneg %p42
        %p229 = pneg %p66
        %p230 = pneg %p63
        %p231 = pneg %p87
        %p232 = pneg %p84
        %p233 = pneg %p108
        %p234 = pneg %p105
        %p235 = pneg %p129
        %p236 = pneg %p126
        %p237 = pneg %p155
        %p238 = pneg %p152
        %s239 = sand.u32 %s142, 1
        %s240 = scalar_lea.sflag [#allocation4], %s239
        %s241 = sand.u32 %s142, 1
        %s242 = smul.addr %s241, 16
        %s243 = scalar_lea.vmem [#allocation5], %s242
        %p244 = scmp.lt.s32.totalorder %s20, 0
        %s245 = scalar_select %p244, %s20, 0
        %s246 = smul.u32 2, %s245
        %p247 = scmp.lt.s32.totalorder %s246, 1
        %s248 = scalar_select %p247, %s246, 1
        %s249 = smul.addr %s248, 8
        %s250 = scalar_lea.vmem %s0, %s249
        %p251 = scmp.lt.s32.totalorder %s20, 0
        %s252 = scalar_select %p251, %s20, 0
        %s253 = smul.u32 2, %s252
        %s254 = smul.u32 2, %s20
        %s255 = ssub.s32 3, %s254
        %p256 = scmp.lt.s32.totalorder %s255, 2
        %s257 = scalar_select %p256, %s255, 2
        %s258 = smul.u32 128, %s257
        %s260 = smul.u32 %s20, 16
        %p261 = scmp.ge.s32.totalorder %s260, 16
        // Predicated region
        $region45: #{tpu_custom_call.1} parent=39 // pred_check
          %p262 = pneg %p261
        $region46: #{tpu_custom_call.1} parent=39 // pred_check_branch
          %264 = sbr.rel (%p262) target = $region48
        $region47: #{tpu_custom_call.1} parent=39 // pred_region
          %265 = vst [vmem:[%s243] sm:$0xff] 0.0
          %266 = vst [vmem:[%s243 + $0x8] sm:$0xff] 0.0
        $region48: #{tpu_custom_call.1} parent=39 // pred_fallthru
          _
        %p267 = scmp.lt.s32.totalorder %s260, 16
        // Predicated region
        $region49: #{tpu_custom_call.1} parent=39 // pred_check
          %p268 = pneg %p267
        $region50: #{tpu_custom_call.1} parent=39 // pred_check_branch
          %270 = sbr.rel (%p268) target = $region52
        $region51: #{tpu_custom_call.1} parent=39 // pred_region
          %v271 = vld [vmem:[%s250] sm:$0xff]
          %v272 = vld [vmem:[%s250 + $0x8] sm:$0xff]
          %v273 = vld [vmem:[%s1] sm:$0x77]
          %v274 = vld [vmem:[%s2] sm:$0x3]
          %276 = vset.pattern.permute.xlu0 0
          %277 = vperm.xlu0 %276, %v271
          %v278 = vpop.permute.xlu0 %277
          %281 = vset.pattern.permute.xlu0 0
          %282 = vperm.xlu0 %281, %v272
          %v283 = vpop.permute.xlu0 %282
          %v286 = vlaneseq
          %v287 = vshrl.u32 %v286, 7
          %v288 = vsub.s32 0, %v287
          %v289 = vrot.slane %v273, %v288
          %v290 = vlaneseq
          %v291 = vshrl.u32 %v290, 7
          %v292 = vsub.s32 4, %v291
          %v293 = vrot.slane %v273, %v292
          %v296 = vlaneseq
          %v297 = vshrl.u32 %v296, 7
          %v298 = vsub.s32 0, %v297
          %v299 = vrot.slane %v289, %v298
          %v300 = vlaneseq
          %v301 = vshrl.u32 %v300, 7
          %v302 = vsub.s32 0, %v301
          %v303 = vrot.slane %v293, %v302
          %v304 = vmul.f32 %v278, %v299
          %v305 = vmul.f32 %v278, %v303
          %v306 = vmul.f32 %v283, %v299
          %v307 = vmul.f32 %v283, %v303
          %v309 = vlaneseq
          %v310 = vshrl.u32 %v309, 7
          %v311 = vsub.s32 0, %v310
          %v312 = vrot.slane %v274, %v311
          %v313 = vlaneseq
          %v314 = vshrl.u32 %v313, 7
          %v315 = vsub.s32 1, %v314
          %v316 = vrot.slane %v274, %v315
          %v319 = vadd.f32 %v312, %v304
          %v320 = vadd.f32 %v316, %v305
          %v321 = vadd.f32 %v312, %v306
          %v322 = vadd.f32 %v316, %v307
          %323 = vset.pattern.permute.xlu0 1
          %324 = vperm.xlu0 %323, %v271
          %v325 = vpop.permute.xlu0 %324
          %327 = vset.pattern.permute.xlu0 1
          %328 = vperm.xlu0 %327, %v272
          %v329 = vpop.permute.xlu0 %328
          %v331 = vlaneseq
          %v332 = vshrl.u32 %v331, 7
          %v333 = vsub.s32 1, %v332
          %v334 = vrot.slane %v273, %v333
          %v335 = vlaneseq
          %v336 = vshrl.u32 %v335, 7
          %v337 = vsub.s32 5, %v336
          %v338 = vrot.slane %v273, %v337
          %v341 = vlaneseq
          %v342 = vshrl.u32 %v341, 7
          %v343 = vsub.s32 1, %v342
          %v344 = vrot.slane %v334, %v343
          %v345 = vlaneseq
          %v346 = vshrl.u32 %v345, 7
          %v347 = vsub.s32 1, %v346
          %v348 = vrot.slane %v338, %v347
          %v349 = vmul.f32 %v325, %v344
          %v350 = vmul.f32 %v325, %v348
          %v351 = vmul.f32 %v329, %v344
          %v352 = vmul.f32 %v329, %v348
          %v353 = vadd.f32 %v319, %v349
          %v354 = vadd.f32 %v320, %v350
          %v355 = vadd.f32 %v321, %v351
          %v356 = vadd.f32 %v322, %v352
          %357 = vset.pattern.permute.xlu0 2
          %358 = vperm.xlu0 %357, %v271
          %v359 = vpop.permute.xlu0 %358
          %361 = vset.pattern.permute.xlu0 2
          %362 = vperm.xlu0 %361, %v272
          %v363 = vpop.permute.xlu0 %362
          %v365 = vlaneseq
          %v366 = vshrl.u32 %v365, 7
          %v367 = vsub.s32 2, %v366
          %v368 = vrot.slane %v273, %v367
          %v369 = vlaneseq
          %v370 = vshrl.u32 %v369, 7
          %v371 = vsub.s32 6, %v370
          %v372 = vrot.slane %v273, %v371
          %v375 = vlaneseq
          %v376 = vshrl.u32 %v375, 7
          %v377 = vsub.s32 2, %v376
          %v378 = vrot.slane %v368, %v377
          %v379 = vlaneseq
          %v380 = vshrl.u32 %v379, 7
          %v381 = vsub.s32 2, %v380
          %v382 = vrot.slane %v372, %v381
          %v383 = vmul.f32 %v359, %v378
          %v384 = vmul.f32 %v359, %v382
          %v385 = vmul.f32 %v363, %v378
          %v386 = vmul.f32 %v363, %v382
          %v387 = vadd.f32 %v353, %v383
          %v388 = vadd.f32 %v354, %v384
          %v389 = vadd.f32 %v355, %v385
          %v390 = vadd.f32 %v356, %v386
          %v391 = vmul.f32 %v387, 0.01
          %v392 = vmul.f32 %v388, 0.01
          %v393 = vmul.f32 %v389, 0.01
          %v394 = vmul.f32 %v390, 0.01
          %v395 = vmax.f32 %v387, %v391
          %v396 = vmax.f32 %v388, %v392
          %v397 = vmax.f32 %v389, %v393
          %v398 = vmax.f32 %v390, %v394
          %v399 = vpack.c.bf16 %v397, %v395
          %v400 = vpack.c.bf16 %v398, %v396
          %v401 = vld [vmem:[#allocation2] sm:$0xf]
          %v402 = vld [vmem:[#allocation2 + $0x4] sm:$0xf]
          %v403 = vld [vmem:[#allocation2 + $0x8] sm:$0xf]
          %v404 = vld [vmem:[#allocation2 + $0xc] sm:$0xf]
          %v405 = vld [vmem:[#allocation2 + $0x10] sm:$0xf]
          %v406 = vld [vmem:[#allocation2 + $0x14] sm:$0xf]
          %v407 = vld [vmem:[#allocation2 + $0x18] sm:$0xf]
          %v408 = vld [vmem:[#allocation2 + $0x1c] sm:$0xf]
          %v409 = vld [vmem:[#allocation2 + $0x20] sm:$0xf]
          %v410 = vld [vmem:[#allocation2 + $0x24] sm:$0xf]
          %v411 = vld [vmem:[#allocation2 + $0x28] sm:$0xf]
          %v412 = vld [vmem:[#allocation2 + $0x2c] sm:$0xf]
          %v413 = vld [vmem:[#allocation2 + $0x30] sm:$0xf]
          %v414 = vld [vmem:[#allocation2 + $0x34] sm:$0xf]
          %v415 = vld [vmem:[#allocation2 + $0x38] sm:$0xf]
          %v416 = vld [vmem:[#allocation2 + $0x3c] sm:$0xf]
          %v417 = vld [vmem:[#allocation2 + $0x40] sm:$0xf]
          %v418 = vld [vmem:[#allocation2 + $0x44] sm:$0xf]
          %v419 = vld [vmem:[#allocation2 + $0x48] sm:$0xf]
          %v420 = vld [vmem:[#allocation2 + $0x4c] sm:$0xf]
          %v421 = vld [vmem:[#allocation2 + $0x50] sm:$0xf]
          %v422 = vld [vmem:[#allocation2 + $0x54] sm:$0xf]
          %v423 = vld [vmem:[#allocation2 + $0x58] sm:$0xf]
          %v424 = vld [vmem:[#allocation2 + $0x5c] sm:$0xf]
          %v425 = vld [vmem:[#allocation2 + $0x60] sm:$0xf]
          %v426 = vld [vmem:[#allocation2 + $0x64] sm:$0xf]
          %v427 = vld [vmem:[#allocation2 + $0x68] sm:$0xf]
          %v428 = vld [vmem:[#allocation2 + $0x6c] sm:$0xf]
          %v429 = vld [vmem:[#allocation2 + $0x70] sm:$0xf]
          %v430 = vld [vmem:[#allocation2 + $0x74] sm:$0xf]
          %v431 = vld [vmem:[#allocation2 + $0x78] sm:$0xf]
          %v432 = vld [vmem:[#allocation2 + $0x7c] sm:$0xf]
          %v433 = vld [vmem:[%s4] sm:$0x1]
          %v435 = vlaneseq
          %v436 = vshrl.u32 %v435, 7
          %v437 = vsub.s32 0, %v436
          %v438 = vrot.slane %v433, %v437
          %v472 = vunpack.c.l.b16 %v401
          %v473 = vunpack.c.l.b16 %v402
          %v474 = vunpack.c.l.b16 %v403
          %v475 = vunpack.c.l.b16 %v404
          %v476 = vunpack.c.l.b16 %v405
          %v477 = vunpack.c.l.b16 %v406
          %v478 = vunpack.c.l.b16 %v407
          %v479 = vunpack.c.l.b16 %v408
          %v480 = vunpack.c.l.b16 %v409
          %v481 = vunpack.c.l.b16 %v410
          %v482 = vunpack.c.l.b16 %v411
          %v483 = vunpack.c.l.b16 %v412
          %v484 = vunpack.c.l.b16 %v413
          %v485 = vunpack.c.l.b16 %v414
          %v486 = vunpack.c.l.b16 %v415
          %v487 = vunpack.c.l.b16 %v416
          %v488 = vunpack.c.l.b16 %v417
          %v489 = vunpack.c.l.b16 %v418
          %v490 = vunpack.c.l.b16 %v419
          %v491 = vunpack.c.l.b16 %v420
          %v492 = vunpack.c.l.b16 %v421
          %v493 = vunpack.c.l.b16 %v422
          %v494 = vunpack.c.l.b16 %v423
          %v495 = vunpack.c.l.b16 %v424
          %v496 = vunpack.c.l.b16 %v425
          %v497 = vunpack.c.l.b16 %v426
          %v498 = vunpack.c.l.b16 %v427
          %v499 = vunpack.c.l.b16 %v428
          %v500 = vunpack.c.l.b16 %v429
          %v501 = vunpack.c.l.b16 %v430
          %v502 = vunpack.c.l.b16 %v431
          %v503 = vunpack.c.l.b16 %v432
          %v504 = vpack.c.b16 %v473, %v472
          %v505 = vpack.c.b16 %v475, %v474
          %v506 = vpack.c.b16 %v477, %v476
          %v507 = vpack.c.b16 %v479, %v478
          %v508 = vpack.c.b16 %v481, %v480
          %v509 = vpack.c.b16 %v483, %v482
          %v510 = vpack.c.b16 %v485, %v484
          %v511 = vpack.c.b16 %v487, %v486
          %v512 = vpack.c.b16 %v489, %v488
          %v513 = vpack.c.b16 %v491, %v490
          %v514 = vpack.c.b16 %v493, %v492
          %v515 = vpack.c.b16 %v495, %v494
          %v516 = vpack.c.b16 %v497, %v496
          %v517 = vpack.c.b16 %v499, %v498
          %v518 = vpack.c.b16 %v501, %v500
          %v519 = vpack.c.b16 %v503, %v502
          %536 = vmatprep.subr.bf16.mxu0 0
          %537 = vmatpush1.bf16.msra.mxu0 %v504
          %538 = vmatprep.subr.bf16.mxu0 0
          %539 = vmatpush1.bf16.msra.mxu0 %v505
          %540 = vmatprep.subr.bf16.mxu0 0
          %541 = vmatpush1.bf16.msra.mxu0 %v506
          %542 = vmatprep.subr.bf16.mxu0 0
          %543 = vmatpush1.bf16.msra.mxu0 %v507
          %544 = vmatprep.subr.bf16.mxu0 0
          %545 = vmatpush1.bf16.msra.mxu0 %v508
          %546 = vmatprep.subr.bf16.mxu0 0
          %547 = vmatpush1.bf16.msra.mxu0 %v509
          %548 = vmatprep.subr.bf16.mxu0 0
          %549 = vmatpush1.bf16.msra.mxu0 %v510
          %550 = vmatprep.subr.bf16.mxu0 0
          %551 = vmatpush1.bf16.msra.mxu0 %v511
          %552 = vmatprep.subr.bf16.mxu0 0
          %553 = vmatpush1.bf16.msra.mxu0 %v512
          %554 = vmatprep.subr.bf16.mxu0 0
          %555 = vmatpush1.bf16.msra.mxu0 %v513
          %556 = vmatprep.subr.bf16.mxu0 0
          %557 = vmatpush1.bf16.msra.mxu0 %v514
          %558 = vmatprep.subr.bf16.mxu0 0
          %559 = vmatpush1.bf16.msra.mxu0 %v515
          %560 = vmatprep.subr.bf16.mxu0 0
          %561 = vmatpush1.bf16.msra.mxu0 %v516
          %562 = vmatprep.subr.bf16.mxu0 0
          %563 = vmatpush1.bf16.msra.mxu0 %v517
          %564 = vmatprep.subr.bf16.mxu0 0
          %565 = vmatpush1.bf16.msra.mxu0 %v518
          %566 = vmatprep.subr.bf16.mxu0 0
          %567 = vmatpush1.bf16.msra.mxu0 %v519
          %568 = vmatprep.mubr.bf16.mxu0 %v400
          %569 = vmatmul.mubr.bf16.gmra.mrb[0].mxu0 %v399
          %v570 = vpop.f32.mrb[0].mxu0
          %v571 = vadd.f32 %v438, %v570
          %v572 = vpop.f32.mrb[0].mxu0
          %v573 = vpop.f32.mrb[0].mxu0
          %v574 = vadd.f32 %v438, %v573
          %v575 = vpop.f32.mrb[0].mxu0
          %576 = vdwg.mxu0
          %s577 = sadd.s32 %s260, 16
          %p578 = scmp.gt.s32.totalorder %s577, 16
          // Predicated region
          $region53: #{tpu_custom_call.1} parent=51 // pred_check
            %p579 = pneg %p578
          $region54: #{tpu_custom_call.1} parent=51 // pred_check_branch
            %581 = sbr.rel (%p579) target = $region56
          $region55: #{tpu_custom_call.1} parent=51 // pred_region
            %v582 = vlaneseq
            %v583 = vshrl.u32 %v582, 7
            %v584 = vadd.s32 %v583, 8
            %v585 = vstv %s260
            %v586 = vadd.s32 %v585, %v583
            %v587 = vadd.s32 %v585, %v584
            %vm588 = vcmp.lt.s32.totalorder %v586, 16
            %vm589 = vcmp.lt.s32.totalorder %v587, 16
            %v590 = vsel %vm588, 1, 0
            %v591 = vsel %vm589, 1, 0
            %vm592 = vcmp.eq.s32.totalorder %v590, 1
            %vm593 = vcmp.eq.s32.totalorder %v591, 1
            %v594 = vsel %vm592, %v571, 0.0
            %v595 = vsel %vm593, %v574, 0.0
            %596 = vst [vmem:[%s243] sm:$0xff] %v594
            %597 = vst [vmem:[%s243 + $0x8] sm:$0xff] %v595
          $region56: #{tpu_custom_call.1} parent=51 // pred_fallthru
            _
          %p598 = scmp.le.s32.totalorder %s577, 16
          // Predicated region
          $region57: #{tpu_custom_call.1} parent=51 // pred_check
            %p599 = pneg %p598
          $region58: #{tpu_custom_call.1} parent=51 // pred_check_branch
            %601 = sbr.rel (%p599) target = $region60
          $region59: #{tpu_custom_call.1} parent=51 // pred_region
            %602 = vst [vmem:[%s243] sm:$0xff] %v571
            %603 = vst [vmem:[%s243 + $0x8] sm:$0xff] %v574
          $region60: #{tpu_custom_call.1} parent=51 // pred_fallthru
            _
        $region52: #{tpu_custom_call.1} parent=39 // pred_fallthru
          _
        %s604 = sand.u32 %s142, 1
        %s605 = scalar_lea.sflag [#allocation4], %s604
        %s606 = sand.u32 %s142, 1
        %s607 = smul.addr %s606, 16
        %s608 = scalar_lea.vmem [#allocation5], %s607
        // Predicated region
        $region61: #{tpu_custom_call.1} parent=39 // pred_check
          %p609 = pneg %p152
        $region62: #{tpu_custom_call.1} parent=39 // pred_check_branch
          %611 = sbr.rel (%p609) target = $region64
        $region63: #{tpu_custom_call.1} parent=39 // pred_region
          %s612 = smul.u32 2, %s20
          %s613 = ssub.s32 3, %s612
          %p614 = scmp.lt.s32.totalorder %s613, 2
          %s615 = scalar_select %p614, %s613, 2
          %s616 = smul.u32 128, %s615
          %s618 = ssub.s32 256, %s616
          %619 = vsyncadd %s605, %s618
          %p620 = scmp.ne.s32.totalorder 0, %s616
          %s621 = smul.addr %s612, 128
          %s622 = scalar_lea.hbm %s5, %s621
          %s623 = smul.u32 8, %s615
          %s624 = sshll.u32 %s608, 4
          %s625 = int_to_ptr.vmem [resolvable:$true] %s624
          %s626 = sshll.u32 %s623, 4
          %630 = dma.vmem_to_hbm [thread:$0]  (%p620), %s625, %s626, %s622, %s605, 128, 128, 8
        $region64: #{tpu_custom_call.1} parent=39 // pred_fallthru
          _
      $region40: #{tpu_custom_call.1} parent=5 // pred_fallthru
        _
      %p631 = scmp.le.s32.totalorder 2, %s15
      // Predicated region
      $region65: #{tpu_custom_call.1} parent=5 // pred_check
        %p632 = pneg %p631
      $region66: #{tpu_custom_call.1} parent=5 // pred_check_branch
        %634 = sbr.rel (%p632) target = $region68
      $region67: #{tpu_custom_call.1} parent=5 // pred_region
        %s635 = ssub.s32 %s15, 2
        // Predicated region
        $region69: #{tpu_custom_call.1} parent=67 // pred_check
          %p636 = pneg %p158
        $region70: #{tpu_custom_call.1} parent=67 // pred_check_branch
          %638 = sbr.rel (%p636) target = $region72
        $region71: #{tpu_custom_call.1} parent=67 // pred_region
          %s639 = sand.u32 %s143, 1
          %s640 = scalar_lea.sflag [#allocation4], %s639
          %s641 = sand.u32 %s143, 1
          %s642 = smul.addr %s641, 16
          %s643 = scalar_lea.vmem [#allocation5], %s642
          %644 = dma.done %s640, 256
        $region72: #{tpu_custom_call.1} parent=67 // pred_fallthru
          _
      $region68: #{tpu_custom_call.1} parent=5 // pred_fallthru
        _
    $region6: #{tpu_custom_call.1} parent=1 // loop_footer
      %s19 = sadd.s32 1, %s15
    $region7: #{tpu_custom_call.1} parent=1 // loop_footer_branch
      %14 = sbr.rel target = $region3
    $region8: #{tpu_custom_call.1} parent=1 // loop_exit
      _
    %645 = vsyncpa [#allocation3], 1
    %s646 = scalar_lea.sflag [#allocation3], 1
    %647 = vsyncpa %s646, 1
    %648 = vsyncpa [#allocation4], 1
    %s649 = scalar_lea.sflag [#allocation4], 1
    %650 = vsyncpa %s649, 1

</llo_original>
